<compile_context>
chip_gen: v7x
topology: tpu7x:2x2x1
jax: 0.10.0
libtpu: 0.0.40
codegen_flags: <defaults>
</compile_context>

<pallas_src>
import functools

import jax
import jax.numpy as jnp
from jax.experimental import pallas as pl
from jax.experimental.pallas import tpu as pltpu

LANE = 128      # lane width (last dim)
SUBLANE = 8     # sublane width (second-to-last dim)


def _round_up(x: int, m: int) -> int:
    return (x + m - 1) // m * m


def _cdiv(a: int, b: int) -> int:
    return -(-a // b)


def _choose_tk(kp: int, block_k: int) -> int:
    """Largest multiple of 128 <= block_k that divides kp (kp is a multiple of 128)."""
    if kp <= block_k:
        return kp
    d = (block_k // LANE) * LANE
    while d >= LANE:
        if kp % d == 0:
            return d
        d -= LANE
    return LANE


# ----------------------------- kernels ------------------------------------- #

def _linear_kernel(x_ref, w_ref, b_ref, o_ref, acc_ref):
    # y = x @ W + b, W stored (in, out); K reduction over grid axis 1.
    k = pl.program_id(1)

    @pl.when(k == 0)
    def _init():
        acc_ref[...] = jnp.zeros_like(acc_ref)

    x = x_ref[...].astype(w_ref.dtype)          # no-op in f32 mode; bf16 path feeds MXU
    acc_ref[...] += jnp.dot(x, w_ref[...], preferred_element_type=jnp.float32)

    @pl.when(k == pl.num_programs(1) - 1)
    def _finalize():
        o_ref[...] = (acc_ref[...] + b_ref[...]).astype(o_ref.dtype)


def _mlp_kernel(x_ref, w1_ref, b1_ref, w2_ref, b2_ref, o_ref, h_acc_ref):
    # hidden = ReLU(x @ W1 + b1) accumulated in f32 over the K grid axis;
    # second matmul + bias at the last K step.  Dropout(0.1) is identity (eval).
    k = pl.program_id(1)

    @pl.when(k == 0)
    def _init():
        h_acc_ref[...] = jnp.zeros_like(h_acc_ref)

    x = x_ref[...].astype(w1_ref.dtype)
    h_acc_ref[...] += jnp.dot(x, w1_ref[...], preferred_element_type=jnp.float32)

    @pl.when(k == pl.num_programs(1) - 1)
    def _finalize():
        h = jnp.maximum(h_acc_ref[...] + b1_ref[...], 0.0)
        h = h.astype(w2_ref.dtype)
        y = jnp.dot(h, w2_ref[...], preferred_element_type=jnp.float32)
        o_ref[...] = (y + b2_ref[...]).astype(o_ref.dtype)


# ----------------------------- param prep ---------------------------------- #

def init_params(key, input_size, num_classes, hidden_layer, hidden_size):
    """PyTorch-layout params (weight is (out, in)), uniform(-1/sqrt(in), 1/sqrt(in))."""
    def linear_init(k, fan_in, fan_out):
        kw, kb = jax.random.split(k)
        bound = 1.0 / jnp.sqrt(fan_in)
        w = jax.random.uniform(kw, (fan_out, fan_in), jnp.float32, -bound, bound)
        b = jax.random.uniform(kb, (fan_out,), jnp.float32, -bound, bound)
        return w, b

    if not hidden_layer:
        w, b = linear_init(key, input_size, num_classes)
        return {"w": w, "b": b}

    k1, k2 = jax.random.split(key)
    w1, b1 = linear_init(k1, input_size, hidden_size)
    w2, b2 = linear_init(k2, hidden_size, num_classes)
    return {"w1": w1, "b1": b1, "w2": w2, "b2": b2}


def prepare_params(params, *, hidden_layer, use_bf16=False, hidden_multiple=LANE):
    """One-time conversion to kernel layout: transpose to (in, out); zero-pad the
    contraction dim to a multiple of 128 and the output/hidden dims to lane
    multiples.  Zero padding is exact: padded x columns hit zero W rows, and the
    hidden-dim padding relies on ReLU(0)=0 together with zero W2 rows.
    `hidden_multiple=256` can be used on v6e/v7x to match the 256-wide MXU."""
    w_dtype = jnp.bfloat16 if use_bf16 else jnp.float32

    def pack(w, b, in_multiple, out_multiple):           # w: (out, in), b: (out,)
        out_dim, in_dim = w.shape
        in_pad = _round_up(in_dim, in_multiple)
        out_pad = _round_up(out_dim, out_multiple)
        wt = jnp.zeros((in_pad, out_pad), w_dtype)
        wt = wt.at[:in_dim, :out_dim].set(w.T.astype(w_dtype))
        bp = jnp.zeros((1, out_pad), jnp.float32)
        bp = bp.at[0, :out_dim].set(b.astype(jnp.float32))
        return wt, bp

    if not hidden_layer:
        wt, bp = pack(params["w"], params["b"], LANE, LANE)
        return {"wt": wt, "b": bp, "num_classes": int(params["w"].shape[0])}

    w1t, b1p = pack(params["w1"], params["b1"], LANE, hidden_multiple)
    w2t, b2p = pack(params["w2"], params["b2"], hidden_multiple, LANE)
    return {"w1t": w1t, "b1": b1p, "w2t": w2t, "b2": b2p,
            "num_classes": int(params["w2"].shape[0])}


# ----------------------------- wrapper -------------------------------------- #

@functools.partial(
    jax.jit,
    static_argnames=("hidden_layer", "num_classes", "block_m", "block_k"))
def _forward(x, arrays, *, hidden_layer, num_classes, block_m, block_k):
    B, K = x.shape
    block_k = max(int(block_k), LANE)

    # Batch tiling: pad only to a multiple of 8 (ragged last block is handled by
    # Pallas); keep at least 2 batch tiles so both v7x TensorCores get work.
    nm = max(_cdiv(B, block_m), 2 if B > SUBLANE else 1)
    TM = _round_up(_cdiv(B, nm), SUBLANE)
    Bp = _round_up(B, SUBLANE)
    grid_m = _cdiv(Bp, TM)

    if not hidden_layer:
        w, b = arrays["wt"], arrays["b"]                  # (Kp, Np), (1, Np)
        Kp, Np = w.shape
    else:
        w1, b1 = arrays["w1t"], arrays["b1"]              # (Kp, Hp), (1, Hp)
        w2, b2 = arrays["w2t"], arrays["b2"]              # (Hp, Np), (1, Np)
        Kp, Hp = w1.shape
        Np = w2.shape[1]

    # Contraction tiling (innermost grid axis, "arbitrary").
    TK = _choose_tk(Kp, block_k)
    nk = Kp // TK

    # Zero-pad x to (Bp, Kp): exact (zero x columns multiply zero weight rows).
    if (Bp, Kp) != (B, K):
        x = jnp.pad(x, ((0, Bp - B), (0, Kp - K)))

    x_bytes = x.dtype.itemsize
    out_dtype = x.dtype
    out_bytes = out_dtype.itemsize

    resident = pl.Buffered(1)     # constant-index-map blocks: single buffer
    streamed = pl.Buffered(2)     # index changes across the grid: double buffer

    if not hidden_layer:
        wb = w.dtype.itemsize
        w_mode = resident if nk == 1 else streamed
        w_bufs = 1 if nk == 1 else 2
        need = (2 * TM * TK * x_bytes + 2 * TM * Np * out_bytes
                + w_bufs * TK * Np * wb + Np * 4 + TM * Np * 4)
        vmem_limit = int(min(128 << 20, max(need + (4 << 20), 32 << 20)))
        cost = pl.CostEstimate(
            flops=2 * B * Kp * Np, transcendentals=0,
            bytes_accessed=(Bp * Kp * x_bytes + w.size * wb + b.size * 4
                            + Bp * Np * out_bytes))
        out = pl.pallas_call(
            _linear_kernel,
            out_shape=jax.ShapeDtypeStruct((Bp, Np), out_dtype),
            grid=(grid_m, nk),
            in_specs=[
                pl.BlockSpec((TM, TK), lambda i, k: (i, k)),
                pl.BlockSpec((TK, Np), lambda i, k: (k, 0), pipeline_mode=w_mode),
                pl.BlockSpec((1, Np), lambda i, k: (0, 0), pipeline_mode=resident),
            ],
            out_specs=pl.BlockSpec((TM, Np), lambda i, k: (i, 0)),
            scratch_shapes=[pltpu.VMEM((TM, Np), jnp.float32)],
            compiler_params=pltpu.CompilerParams(
                dimension_semantics=("parallel", "arbitrary"),
                vmem_limit_bytes=vmem_limit),
            cost_estimate=cost,
        )(x, w, b)
        return out[:B, :num_classes]

    wb = w1.dtype.itemsize
    w1_mode = resident if nk == 1 else streamed
    w1_bufs = 1 if nk == 1 else 2
    need = (2 * TM * TK * x_bytes + 2 * TM * Np * out_bytes
            + w1_bufs * TK * Hp * wb + Hp * 4
            + Hp * Np * wb + Np * 4 + TM * Hp * 4)
    vmem_limit = int(min(128 << 20, max(need + (4 << 20), 32 << 20)))
    cost = pl.CostEstimate(
        flops=2 * B * Kp * Hp + 2 * B * Hp * Np, transcendentals=0,
        bytes_accessed=(Bp * Kp * x_bytes + (w1.size + w2.size) * wb
                        + (b1.size + b2.size) * 4 + Bp * Np * out_bytes))
    out = pl.pallas_call(
        _mlp_kernel,
        out_shape=jax.ShapeDtypeStruct((Bp, Np), out_dtype),
        grid=(grid_m, nk),
        in_specs=[
            pl.BlockSpec((TM, TK), lambda i, k: (i, k)),
            pl.BlockSpec((TK, Hp), lambda i, k: (k, 0), pipeline_mode=w1_mode),
            pl.BlockSpec((1, Hp), lambda i, k: (0, 0), pipeline_mode=resident),
            pl.BlockSpec((Hp, Np), lambda i, k: (0, 0), pipeline_mode=resident),
            pl.BlockSpec((1, Np), lambda i, k: (0, 0), pipeline_mode=resident),
        ],
        out_specs=pl.BlockSpec((TM, Np), lambda i, k: (i, 0)),
        scratch_shapes=[pltpu.VMEM((TM, Hp), jnp.float32)],
        compiler_params=pltpu.CompilerParams(
            dimension_semantics=("parallel", "arbitrary"),
            vmem_limit_bytes=vmem_limit),
        cost_estimate=cost,
    )(x, w1, b1, w2, b2)
    return out[:B, :num_classes]


def classification_head(x, kparams, *, hidden_layer: bool,
                        block_m: int = 256, block_k: int = 2048):
    """Pallas forward pass. x: (batch, input_size); kparams from prepare_params."""
    num_classes = kparams["num_classes"]                    # static Python int
    arrays = {k: v for k, v in kparams.items() if k != "num_classes"}
    return _forward(x, arrays, hidden_layer=hidden_layer, num_classes=num_classes,
                    block_m=block_m, block_k=block_k)


# ----------------------------- main ----------------------------------------- #

if __name__ == "__main__":
    key = jax.random.PRNGKey(0)
    kx, kp1, kp2, kx2 = jax.random.split(key, 4)

    batch, input_size, num_classes, hidden_size = 2, 32, 10, 128
    x = jax.random.normal(kx, (batch, input_size), jnp.float32)

    # Path 1: plain Linear head (f32).
    params_lin = init_params(kp1, input_size, num_classes, hidden_layer=False,
                             hidden_size=hidden_size)
    kparams_lin = prepare_params(params_lin, hidden_layer=False)
    y_lin = jax.block_until_ready(
        classification_head(x, kparams_lin, hidden_layer=False))
    ref_lin = x @ params_lin["w"].T + params_lin["b"]
    assert y_lin.shape == (batch, num_classes)
    assert jnp.allclose(y_lin, ref_lin, atol=1e-5, rtol=1e-5)

    # Path 2: hidden-layer head (Linear -> ReLU -> Dropout(eval) -> Linear), f32.
    params_mlp = init_params(kp2, input_size, num_classes, hidden_layer=True,
                             hidden_size=hidden_size)
    kparams_mlp = prepare_params(params_mlp, hidden_layer=True)
    y_mlp = jax.block_until_ready(
        classification_head(x, kparams_mlp, hidden_layer=True))
    h_ref = jnp.maximum(x @ params_mlp["w1"].T + params_mlp["b1"], 0.0)
    ref_mlp = h_ref @ params_mlp["w2"].T + params_mlp["b2"]
    assert y_mlp.shape == (batch, num_classes)
    assert jnp.allclose(y_mlp, ref_mlp, atol=1e-5, rtol=1e-5)

    # Path 3: exercise K-tiled reduction + ragged batch tiles (small shapes).
    b3, k3 = 20, 256
    x3 = jax.random.normal(kx2, (b3, k3), jnp.float32)
    params_mlp3 = init_params(kp2, k3, num_classes, hidden_layer=True,
                              hidden_size=hidden_size)
    kparams_mlp3 = prepare_params(params_mlp3, hidden_layer=True)
    y3 = jax.block_until_ready(
        classification_head(x3, kparams_mlp3, hidden_layer=True, block_k=128))
    h3 = jnp.maximum(x3 @ params_mlp3["w1"].T + params_mlp3["b1"], 0.0)
    ref3 = h3 @ params_mlp3["w2"].T + params_mlp3["b2"]
    assert y3.shape == (b3, num_classes)
    assert jnp.allclose(y3, ref3, atol=1e-4, rtol=1e-4)

    # Path 4: bf16 weight path (f32 accumulation), loose tolerance.
    kparams_bf16 = prepare_params(params_lin, hidden_layer=False, use_bf16=True)
    y_bf16 = jax.block_until_ready(
        classification_head(x, kparams_bf16, hidden_layer=False))
    assert y_bf16.shape == (batch, num_classes)
    assert jnp.allclose(y_bf16, ref_lin, atol=5e-2, rtol=5e-2)

    print("KERNEL_OK")
</pallas_src>

<mosaic_0001>
module attributes {stable_mosaic.version = 11 : i64} {
  func.func @_linear_kernel(%arg0: i32, %arg1: i32, %arg2: memref<8x128xf32, #tpu.memory_space<vmem>>, %arg3: memref<128x128xf32, #tpu.memory_space<vmem>>, %arg4: memref<1x128xf32, #tpu.memory_space<vmem>>, %arg5: memref<8x128xf32, #tpu.memory_space<vmem>>, %arg6: memref<8x128xf32, #tpu.memory_space<vmem>>) attributes {dimension_semantics = [#tpu.dimension_semantics<parallel>, #tpu.dimension_semantics<arbitrary>], iteration_bounds = array<i64: 1, 1>, scalar_prefetch = 0 : i64, scratch_operands = 1 : i64, tpu.core_type = #tpu.core_type<tc>, window_params = [{transform_indices = @transform_0, window_bounds = array<i64: 8, 128>}, {pipeline_mode = #tpu.pipeline_mode<synchronous>, transform_indices = @transform_1, window_bounds = array<i64: 128, 128>}, {pipeline_mode = #tpu.pipeline_mode<synchronous>, transform_indices = @transform_2, window_bounds = array<i64: 1, 128>}, {transform_indices = @transform_3, window_bounds = array<i64: 8, 128>}]} {
    %c0_i32 = arith.constant 0 : i32
    %0 = arith.cmpi eq, %arg1, %c0_i32 : i32
    %1 = arith.extui %0 : i1 to i32
    %c0_i32_0 = arith.constant 0 : i32
    %2 = arith.cmpi ne, %1, %c0_i32_0 : i32
    scf.if %2 {
      %cst_10 = arith.constant 0.000000e+00 : f32
      %12 = vector.broadcast %cst_10 : f32 to vector<8x128xf32>
      %c0_11 = arith.constant 0 : index
      %c0_12 = arith.constant 0 : index
      %13 = vector.load %arg6[%c0_11, %c0_12] : memref<8x128xf32, #tpu.memory_space<vmem>>, vector<8x128xf32>
      tpu.vector_store %arg6[%c0_11, %c0_12], %12 {strides = array<i32>} : memref<8x128xf32, #tpu.memory_space<vmem>>, vector<8x128xf32>,
    } else {
    }
    %c0 = arith.constant 0 : index
    %c0_1 = arith.constant 0 : index
    %3 = vector.load %arg2[%c0, %c0_1] : memref<8x128xf32, #tpu.memory_space<vmem>>, vector<8x128xf32>
    %c0_2 = arith.constant 0 : index
    %c0_3 = arith.constant 0 : index
    %4 = vector.load %arg6[%c0_2, %c0_3] : memref<8x128xf32, #tpu.memory_space<vmem>>, vector<8x128xf32>
    %c0_4 = arith.constant 0 : index
    %c0_5 = arith.constant 0 : index
    %5 = vector.load %arg3[%c0_4, %c0_5] : memref<128x128xf32, #tpu.memory_space<vmem>>, vector<128x128xf32>
    %cst = arith.constant dense<0.000000e+00> : vector<8x128xf32>
    %6 = tpu.matmul %3, %5, %cst {dimension_numbers = #tpu.dot_dimension_numbers<[1], [0], [0], [1], [0, 0, 1, 1], [], []>} : vector<8x128xf32>, vector<128x128xf32>, vector<8x128xf32> -> vector<8x128xf32>
    %7 = arith.addf %4, %6 : vector<8x128xf32>
    %c0_6 = arith.constant 0 : index
    %c0_7 = arith.constant 0 : index
    %8 = vector.load %arg6[%c0_6, %c0_7] : memref<8x128xf32, #tpu.memory_space<vmem>>, vector<8x128xf32>
    tpu.vector_store %arg6[%c0_6, %c0_7], %7 {strides = array<i32>} : memref<8x128xf32, #tpu.memory_space<vmem>>, vector<8x128xf32>,
    %c0_i32_8 = arith.constant 0 : i32
    %9 = arith.cmpi eq, %arg1, %c0_i32_8 : i32
    %10 = arith.extui %9 : i1 to i32
    %c0_i32_9 = arith.constant 0 : i32
    %11 = arith.cmpi ne, %10, %c0_i32_9 : i32
    scf.if %11 {
      %c0_10 = arith.constant 0 : index
      %c0_11 = arith.constant 0 : index
      %12 = vector.load %arg6[%c0_10, %c0_11] : memref<8x128xf32, #tpu.memory_space<vmem>>, vector<8x128xf32>
      %c0_12 = arith.constant 0 : index
      %c0_13 = arith.constant 0 : index
      %13 = vector.load %arg4[%c0_12, %c0_13] : memref<1x128xf32, #tpu.memory_space<vmem>>, vector<1x128xf32>
      %14 = vector.broadcast %13 : vector<1x128xf32> to vector<8x128xf32>
      %15 = arith.addf %12, %14 : vector<8x128xf32>
      %c0_14 = arith.constant 0 : index
      %c0_15 = arith.constant 0 : index
      %16 = vector.load %arg5[%c0_14, %c0_15] : memref<8x128xf32, #tpu.memory_space<vmem>>, vector<8x128xf32>
      tpu.vector_store %arg5[%c0_14, %c0_15], %15 {strides = array<i32>} : memref<8x128xf32, #tpu.memory_space<vmem>>, vector<8x128xf32>,
    } else {
    }
    return
  }
  func.func @transform_0(%arg0: i32, %arg1: i32) -> (i32, i32) {
    %c0_i32 = arith.constant 0 : i32
    return %arg0, %arg1 : i32, i32
  }
  func.func @transform_1(%arg0: i32, %arg1: i32) -> (i32, i32) {
    %c0_i32 = arith.constant 0 : i32
    %c0_i32_0 = arith.constant 0 : i32
    return %arg1, %c0_i32 : i32, i32
  }
  func.func @transform_2(%arg0: i32, %arg1: i32) -> (i32, i32) {
    %c0_i32 = arith.constant 0 : i32
    %c0_i32_0 = arith.constant 0 : i32
    %c0_i32_1 = arith.constant 0 : i32
    return %c0_i32, %c0_i32_0 : i32, i32
  }
  func.func @transform_3(%arg0: i32, %arg1: i32) -> (i32, i32) {
    %c0_i32 = arith.constant 0 : i32
    %c0_i32_0 = arith.constant 0 : i32
    return %arg0, %c0_i32 : i32, i32
  }
}

</mosaic_0001>

<llo_original>
// kernel: _forward.1
$region0: #{_forward.1}
  #allocation0 [shape = 'u32[]', space=smem, size = 0x4, offset = 0x4, fixed_abs, tag = 'smem constant byte address 0x4 - core index']
  #allocation1 [shape = 'u32[144,128]{1,0:T(1,128)}', space=vmem, size = 0x12000, scoped, tag = 'internal scratch']
  #allocation2 [shape = 'f32[8,128]{1,0:T(8,128)}', space=vmem, size = 0x1000, scoped, tag = 'scratch operand']
  %s0 = inlined_call_operand.vmem [shape: f32[8,128], index: 0, kind: input, shape index: {}]
  %s1 = inlined_call_operand.hbm [shape: f32[128,128], index: 1, kind: input, shape index: {}]
  %s2 = inlined_call_operand.vmem [shape: f32[1,128], index: 2, kind: input, shape index: {}]
  %s3 = inlined_call_operand.vmem [shape: f32[8,128], index: 3, kind: output, shape index: {}]
  %s4 = sld [smem:[#allocation0]]
  $region34: #{_forward.1} parent=0
    _
  %s6 = ssub.s32 1, %s4
  %s7 = scalar_select 0, %s6, %s4
  $region1: #{_forward.1} parent=0
    #allocation3 [shape = 'u8[65536]{0}', space=vmem, size = 0x10000, scoped, tag = 'input window, operand 1, single buffered']
    #allocation4 [shape = 's32[1]{0}', space=sflag, size = 0x4, scoped, tag = 'scoped memory for _forward.1']
    %8 = vsyncpa [#allocation4], 0
    // Predicated region
    $region2: #{_forward.1} parent=1 // pred_check
      _
    $region3: #{_forward.1} parent=1 // pred_check_branch
      %10 = sbr.rel (0) target = $region5
    $region4: #{_forward.1} parent=1 // pred_region
      _
    $region5: #{_forward.1} parent=1 // pred_fallthru
      _
    // Predicated region
    $region6: #{_forward.1} parent=1 // pred_check
      _
    $region7: #{_forward.1} parent=1 // pred_check_branch
      %12 = sbr.rel (0) target = $region9
    $region8: #{_forward.1} parent=1 // pred_region
      %s14 = ssub.s32 2048, 2048
      %15 = vsyncadd [#allocation4], %s14
      %s16 = sshll.u32 [#allocation3], 4
      %s17 = int_to_ptr.vmem [resolvable:$true] %s16
      %22 = dma.hbm_to_vmem [thread:$0]  %s1, 2048, %s17, [#allocation4], 128, 128, 8
    $region9: #{_forward.1} parent=1 // pred_fallthru
      _
    // Predicated region
    $region10: #{_forward.1} parent=1 // pred_check
      _
    $region11: #{_forward.1} parent=1 // pred_check_branch
      %24 = sbr.rel (0) target = $region13
    $region12: #{_forward.1} parent=1 // pred_region
      _
    $region13: #{_forward.1} parent=1 // pred_fallthru
      _
    // Predicated region
    $region14: #{_forward.1} parent=1 // pred_check
      _
    $region15: #{_forward.1} parent=1 // pred_check_branch
      %26 = sbr.rel (0) target = $region17
    $region16: #{_forward.1} parent=1 // pred_region
      %27 = dma.done [#allocation4], 2048
    $region17: #{_forward.1} parent=1 // pred_fallthru
      _
    %p28 = scmp.eq.s32.totalorder 0, 0
    // Predicated region
    $region18: #{_forward.1} parent=1 // pred_check
      %p29 = pneg %p28
    $region19: #{_forward.1} parent=1 // pred_check_branch
      %31 = sbr.rel (%p29) target = $region21
    $region20: #{_forward.1} parent=1 // pred_region
      %32 = vst [vmem:[#allocation2] sm:$0xff] 0.0
    $region21: #{_forward.1} parent=1 // pred_fallthru
      _
    %v33 = vld [vmem:[%s0] sm:$0xff]
    %v34 = vld [vmem:[#allocation2] sm:$0xff]
    %v35 = vld [vmem:[#allocation3] sm:$0xff]
    %v36 = vld [vmem:[#allocation3 + $0x8] sm:$0xff]
    %v37 = vld [vmem:[#allocation3 + $0x10] sm:$0xff]
    %v38 = vld [vmem:[#allocation3 + $0x18] sm:$0xff]
    %v39 = vld [vmem:[#allocation3 + $0x20] sm:$0xff]
    %v40 = vld [vmem:[#allocation3 + $0x28] sm:$0xff]
    %v41 = vld [vmem:[#allocation3 + $0x30] sm:$0xff]
    %v42 = vld [vmem:[#allocation3 + $0x38] sm:$0xff]
    %v43 = vld [vmem:[#allocation3 + $0x40] sm:$0xff]
    %v44 = vld [vmem:[#allocation3 + $0x48] sm:$0xff]
    %v45 = vld [vmem:[#allocation3 + $0x50] sm:$0xff]
    %v46 = vld [vmem:[#allocation3 + $0x58] sm:$0xff]
    %v47 = vld [vmem:[#allocation3 + $0x60] sm:$0xff]
    %v48 = vld [vmem:[#allocation3 + $0x68] sm:$0xff]
    %v49 = vld [vmem:[#allocation3 + $0x70] sm:$0xff]
    %v50 = vld [vmem:[#allocation3 + $0x78] sm:$0xff]
    %51 = vmatprep.subr.mxu0 0.0
    %52 = vmatpush1.msra.mxu0 %v35
    %53 = vmatprep.subr.mxu0 0.0
    %54 = vmatpush1.msra.mxu0 %v36
    %55 = vmatprep.subr.mxu0 0.0
    %56 = vmatpush1.msra.mxu0 %v37
    %57 = vmatprep.subr.mxu0 0.0
    %58 = vmatpush1.msra.mxu0 %v38
    %59 = vmatprep.subr.mxu0 0.0
    %60 = vmatpush1.msra.mxu0 %v39
    %61 = vmatprep.subr.mxu0 0.0
    %62 = vmatpush1.msra.mxu0 %v40
    %63 = vmatprep.subr.mxu0 0.0
    %64 = vmatpush1.msra.mxu0 %v41
    %65 = vmatprep.subr.mxu0 0.0
    %66 = vmatpush1.msra.mxu0 %v42
    %67 = vmatprep.subr.mxu0 0.0
    %68 = vmatpush1.msra.mxu0 %v43
    %69 = vmatprep.subr.mxu0 0.0
    %70 = vmatpush1.msra.mxu0 %v44
    %71 = vmatprep.subr.mxu0 0.0
    %72 = vmatpush1.msra.mxu0 %v45
    %73 = vmatprep.subr.mxu0 0.0
    %74 = vmatpush1.msra.mxu0 %v46
    %75 = vmatprep.subr.mxu0 0.0
    %76 = vmatpush1.msra.mxu0 %v47
    %77 = vmatprep.subr.mxu0 0.0
    %78 = vmatpush1.msra.mxu0 %v48
    %79 = vmatprep.subr.mxu0 0.0
    %80 = vmatpush1.msra.mxu0 %v49
    %81 = vmatprep.subr.mxu0 0.0
    %82 = vmatpush1.msra.mxu0 %v50
    %83 = vmatprep.subr.mxu0 0.0
    %84 = vmatpush1.msra.mxu0 0.0
    %85 = vmatprep.subr.mxu0 0.0
    %86 = vmatpush1.msra.mxu0 0.0
    %87 = vmatprep.subr.mxu0 0.0
    %88 = vmatpush1.msra.mxu0 0.0
    %89 = vmatprep.subr.mxu0 0.0
    %90 = vmatpush1.msra.mxu0 0.0
    %91 = vmatprep.subr.mxu0 0.0
    %92 = vmatpush1.msra.mxu0 0.0
    %93 = vmatprep.subr.mxu0 0.0
    %94 = vmatpush1.msra.mxu0 0.0
    %95 = vmatprep.subr.mxu0 0.0
    %96 = vmatpush1.msra.mxu0 0.0
    %97 = vmatprep.subr.mxu0 0.0
    %98 = vmatpush1.msra.mxu0 0.0
    %99 = vmatprep.subr.mxu0 0.0
    %100 = vmatpush1.msra.mxu0 0.0
    %101 = vmatprep.subr.mxu0 0.0
    %102 = vmatpush1.msra.mxu0 0.0
    %103 = vmatprep.subr.mxu0 0.0
    %104 = vmatpush1.msra.mxu0 0.0
    %105 = vmatprep.subr.mxu0 0.0
    %106 = vmatpush1.msra.mxu0 0.0
    %107 = vmatprep.subr.mxu0 0.0
    %108 = vmatpush1.msra.mxu0 0.0
    %109 = vmatprep.subr.mxu0 0.0
    %110 = vmatpush1.msra.mxu0 0.0
    %111 = vmatprep.subr.mxu0 0.0
    %112 = vmatpush1.msra.mxu0 0.0
    %113 = vmatprep.subr.mxu0 0.0
    %114 = vmatpush1.msra.mxu0 0.0
    %115 = vmatprep.mubr.f32.mxu0 0.0
    %116 = vmatmul.mubr.f32.gmra.mrb[0].mxu0 %v33
    %v117 = vpop.f32.mrb[0].mxu0
    %v118 = vadd.f32 0.0, %v117
    %v119 = vpop.f32.mrb[0].mxu0
    %120 = vdwg.mxu0
    %v121 = vadd.f32 %v34, %v118
    %122 = vst [vmem:[#allocation2] sm:$0xff] %v121
    // Predicated region
    $region22: #{_forward.1} parent=1 // pred_check
      %p123 = pneg %p28
    $region23: #{_forward.1} parent=1 // pred_check_branch
      %125 = sbr.rel (%p123) target = $region25
    $region24: #{_forward.1} parent=1 // pred_region
      %v126 = vld [vmem:[#allocation2] sm:$0xff]
      %v127 = vld [vmem:[%s2] sm:$0x1]
      %v129 = vlaneseq
      %v130 = vshrl.u32 %v129, 7
      %v131 = vsub.s32 0, %v130
      %v132 = vrot.slane %v127, %v131
      %v134 = vadd.f32 %v126, %v132
      %135 = vst [vmem:[%s3] sm:$0xff] %v134
    $region25: #{_forward.1} parent=1 // pred_fallthru
      _
    // Predicated region
    $region26: #{_forward.1} parent=1 // pred_check
      _
    $region27: #{_forward.1} parent=1 // pred_check_branch
      %137 = sbr.rel (0) target = $region29
    $region28: #{_forward.1} parent=1 // pred_region
      _
    $region29: #{_forward.1} parent=1 // pred_fallthru
      _
    // Predicated region
    $region30: #{_forward.1} parent=1 // pred_check
      _
    $region31: #{_forward.1} parent=1 // pred_check_branch
      %139 = sbr.rel (0) target = $region33
    $region32: #{_forward.1} parent=1 // pred_region
      _
    $region33: #{_forward.1} parent=1 // pred_fallthru
      _
    %140 = vsyncpa [#allocation4], 1

</llo_original>
